<compile_context>
chip_gen: v6e
topology: v6e:2x2x1
jax: 0.10.0
libtpu: 0.0.40
codegen_flags: <defaults>
</compile_context>

<pallas_src>
import functools

import jax
import jax.numpy as jnp
from jax.experimental import pallas as pl
from jax.experimental.pallas import tpu as pltpu

LN_EPS = 1e-5
DTYPE = jnp.bfloat16            # activation / weight storage dtype (MXU input)
VMEM_LIMIT = 48 * 1024 * 1024   # scoped-VMEM budget; safe on v5e/v6e/v7x (64 MiB phys on v7x)

# Tile-size targets (clamped to the actual dims; for realistic BERT sizes these
# become 512/512/512, for the toy config below they collapse to the full dims).
TM, TN, TK = 512, 512, 512


def _pick_tile(dim, target, align):
    """Largest tile <= target that divides dim and is a multiple of `align`,
    otherwise the full dim (block == array dim is always a legal BlockSpec)."""
    if dim <= target:
        return dim
    t = (min(target, dim) // align) * align
    while t >= align:
        if dim % t == 0:
            return t
        t -= align
    return dim


# ----------------------------- Pallas kernels -------------------------------

def _matmul_bias_kernel(x_ref, w_ref, b_ref, o_ref, acc_ref, *, activation):
    """o = act(x @ w + b), K-reduction over grid axis 2, f32 accumulator."""
    @pl.when(pl.program_id(2) == 0)
    def _():
        acc_ref[...] = jnp.zeros_like(acc_ref)

    acc_ref[...] += jnp.dot(x_ref[...], w_ref[...],
                            preferred_element_type=jnp.float32)

    @pl.when(pl.program_id(2) == pl.num_programs(2) - 1)
    def _():
        y = acc_ref[...] + b_ref[...]
        if activation == "gelu":
            y = jax.nn.gelu(y, approximate=False)   # BERT/RoBERTa erf-GELU
        o_ref[...] = y.astype(o_ref.dtype)


def _matmul_add_ln_kernel(x_ref, w_ref, b_ref, r_ref, g_ref, beta_ref,
                          o_ref, acc_ref):
    """o = LayerNorm(x @ w + b + residual); K-reduction over grid axis 1.
    The N (hidden) dim is kept whole in the block so LN sees full rows."""
    @pl.when(pl.program_id(1) == 0)
    def _():
        acc_ref[...] = jnp.zeros_like(acc_ref)

    acc_ref[...] += jnp.dot(x_ref[...], w_ref[...],
                            preferred_element_type=jnp.float32)

    @pl.when(pl.program_id(1) == pl.num_programs(1) - 1)
    def _():
        y = acc_ref[...] + b_ref[...] + r_ref[...].astype(jnp.float32)
        mu = jnp.mean(y, axis=-1, keepdims=True)
        var = jnp.mean(jnp.square(y - mu), axis=-1, keepdims=True)
        y = (y - mu) * jax.lax.rsqrt(var + LN_EPS) * g_ref[...] + beta_ref[...]
        o_ref[...] = y.astype(o_ref.dtype)


def _ln_kernel(x_ref, g_ref, b_ref, o_ref):
    """Row-tiled LayerNorm (no residual) — used for the embedding LN.
    Input stays f32; only the output is cast to the storage dtype."""
    x = x_ref[...].astype(jnp.float32)
    mu = jnp.mean(x, axis=-1, keepdims=True)
    var = jnp.mean(jnp.square(x - mu), axis=-1, keepdims=True)
    y = (x - mu) * jax.lax.rsqrt(var + LN_EPS) * g_ref[...] + b_ref[...]
    o_ref[...] = y.astype(o_ref.dtype)


def _attention_kernel(q_ref, k_ref, v_ref, m_ref, o_ref, *, scale):
    """Softmax attention for one (batch, head, q-tile) grid point.

    q_ref: (1, 1, tq, Dh), k_ref/v_ref: (1, 1, S, Dh), m_ref: (1, 1, S)
    additive mask, o_ref: (1, 1, tq, Dh).  Blocks are lane-exact in Dh (the
    full last dim), heads/q-tiles are parallel grid axes -> no in-kernel head
    slicing, no unrolled head loop, no trailing concatenate.
    """
    q = q_ref[0, 0]                                # (tq, Dh) bf16
    k = k_ref[0, 0]                                # (S,  Dh) bf16
    v = v_ref[0, 0]                                # (S,  Dh) bf16
    m = m_ref[0]                                   # (1,  S) additive mask, f32

    # contract the head-dim of both operands (no explicit K transpose)
    s = jax.lax.dot_general(q, k, (((1,), (1,)), ((), ())),
                            preferred_element_type=jnp.float32)     # (tq, S)
    s = s * scale + m                              # scale+mask applied once
    s = s - jnp.max(s, axis=-1, keepdims=True)
    p = jnp.exp(s)
    # approx reciprocal on the EUP; ~1e-3 rel err, fine for inference.
    p = p * pl.reciprocal(jnp.sum(p, axis=-1, keepdims=True), approx=True)
    o_ref[0, 0] = jnp.dot(p.astype(v.dtype), v,
                          preferred_element_type=jnp.float32).astype(o_ref.dtype)


# ----------------------------- kernel wrappers -------------------------------

def pallas_linear(x, w, b, *, activation=None):
    """y = act(x @ w + b). x: (M, K) bf16, w: (K, N) bf16, b: (N,) f32."""
    M, K = x.shape
    N = w.shape[1]
    tm = _pick_tile(M, TM, 16)      # 16-aligned for bf16 sublane packing
    tn = _pick_tile(N, TN, 128)
    tk = _pick_tile(K, TK, 128)
    kern = functools.partial(_matmul_bias_kernel, activation=activation)
    return pl.pallas_call(
        kern,
        out_shape=jax.ShapeDtypeStruct((M, N), DTYPE),
        grid=(M // tm, N // tn, K // tk),
        in_specs=[pl.BlockSpec((tm, tk), lambda i, j, k: (i, k)),
                  pl.BlockSpec((tk, tn), lambda i, j, k: (k, j)),
                  pl.BlockSpec((1, tn), lambda i, j, k: (0, j))],
        out_specs=pl.BlockSpec((tm, tn), lambda i, j, k: (i, j)),
        scratch_shapes=[pltpu.VMEM((tm, tn), jnp.float32)],
        compiler_params=pltpu.CompilerParams(
            dimension_semantics=("parallel", "parallel", "arbitrary"),
            vmem_limit_bytes=VMEM_LIMIT),
    )(x, w, b.reshape(1, N))


def pallas_linear_add_ln(x, w, b, residual, gamma, beta):
    """LayerNorm(x @ w + b + residual).  N (=hidden) is kept whole per block."""
    M, K = x.shape
    N = w.shape[1]
    tm = _pick_tile(M, TM, 16)
    tk = _pick_tile(K, TK, 128)
    return pl.pallas_call(
        _matmul_add_ln_kernel,
        out_shape=jax.ShapeDtypeStruct((M, N), DTYPE),
        grid=(M // tm, K // tk),
        in_specs=[pl.BlockSpec((tm, tk), lambda i, k: (i, k)),
                  pl.BlockSpec((tk, N), lambda i, k: (k, 0)),
                  pl.BlockSpec((1, N), lambda i, k: (0, 0)),
                  pl.BlockSpec((tm, N), lambda i, k: (i, 0)),
                  pl.BlockSpec((1, N), lambda i, k: (0, 0)),
                  pl.BlockSpec((1, N), lambda i, k: (0, 0))],
        out_specs=pl.BlockSpec((tm, N), lambda i, k: (i, 0)),
        scratch_shapes=[pltpu.VMEM((tm, N), jnp.float32)],
        compiler_params=pltpu.CompilerParams(
            dimension_semantics=("parallel", "arbitrary"),
            vmem_limit_bytes=VMEM_LIMIT),
    )(x, w, b.reshape(1, N), residual, gamma.reshape(1, N), beta.reshape(1, N))


def pallas_layernorm(x, gamma, beta):
    """LayerNorm over last dim, tiled over rows.  Input may be f32; output bf16."""
    M, H = x.shape
    tm = _pick_tile(M, 512, 16)
    return pl.pallas_call(
        _ln_kernel,
        out_shape=jax.ShapeDtypeStruct((M, H), DTYPE),
        grid=(M // tm,),
        in_specs=[pl.BlockSpec((tm, H), lambda i: (i, 0)),
                  pl.BlockSpec((1, H), lambda i: (0, 0)),
                  pl.BlockSpec((1, H), lambda i: (0, 0))],
        out_specs=pl.BlockSpec((tm, H), lambda i: (i, 0)),
        compiler_params=pltpu.CompilerParams(
            dimension_semantics=("parallel",),
            vmem_limit_bytes=VMEM_LIMIT),
    )(x, gamma.reshape(1, H), beta.reshape(1, H))


def pallas_attention(q, k, v, mask, *, scale):
    """Multi-head attention, head-major layout.

    q, k, v: (B, heads, S, Dh) bf16, mask: (B, 1, S) additive.
    Grid (B, heads, q_tiles) — all parallel (feeds both v7x TensorCores even
    at small B).  Returns (B, heads, S, Dh).
    """
    B, NH, S, Dh = q.shape
    tq = _pick_tile(S, 512, 16)
    kern = functools.partial(_attention_kernel, scale=scale)
    return pl.pallas_call(
        kern,
        out_shape=jax.ShapeDtypeStruct((B, NH, S, Dh), DTYPE),
        grid=(B, NH, S // tq),
        in_specs=[pl.BlockSpec((1, 1, tq, Dh), lambda b, h, i: (b, h, i, 0)),
                  pl.BlockSpec((1, 1, S, Dh), lambda b, h, i: (b, h, 0, 0)),
                  pl.BlockSpec((1, 1, S, Dh), lambda b, h, i: (b, h, 0, 0)),
                  pl.BlockSpec((1, 1, S), lambda b, h, i: (b, 0, 0))],
        out_specs=pl.BlockSpec((1, 1, tq, Dh), lambda b, h, i: (b, h, i, 0)),
        compiler_params=pltpu.CompilerParams(
            dimension_semantics=("parallel", "parallel", "parallel"),
            vmem_limit_bytes=VMEM_LIMIT),
    )(q, k, v, mask)


# ----------------------------- parameters ------------------------------------

def init_params(key, *, vocab, max_pos, type_vocab, hidden, layers, heads,
                inter, num_labels):
    del heads  # head count only affects layout glue, not parameter shapes
    keys = iter(jax.random.split(key, 8 + layers * 16))

    def nrm(shape, dtype=DTYPE):
        return (jax.random.normal(next(keys), shape, jnp.float32) * 0.02).astype(dtype)

    params = dict(
        word_emb=nrm((vocab, hidden), jnp.float32),
        pos_emb=nrm((max_pos, hidden), jnp.float32),
        type_emb=nrm((type_vocab, hidden), jnp.float32),
        emb_ln_g=jnp.ones((hidden,), jnp.float32),
        emb_ln_b=jnp.zeros((hidden,), jnp.float32),
        fc_w=nrm((hidden, num_labels), jnp.float32),
        fc_b=jnp.zeros((num_labels,), jnp.float32),
        layers=[],
    )
    for _ in range(layers):
        params['layers'].append(dict(
            # fused Q|K|V projection, packed [q | k | v] along the output dim
            qkv_w=nrm((hidden, 3 * hidden)),
            qkv_b=jnp.zeros((3 * hidden,), jnp.float32),
            ao_w=nrm((hidden, hidden)),
            ao_b=jnp.zeros((hidden,), jnp.float32),
            attn_ln_g=jnp.ones((hidden,), jnp.float32),
            attn_ln_b=jnp.zeros((hidden,), jnp.float32),
            fi_w=nrm((hidden, inter)),
            fi_b=jnp.zeros((inter,), jnp.float32),
            fo_w=nrm((inter, hidden)),
            fo_b=jnp.zeros((hidden,), jnp.float32),
            ffn_ln_g=jnp.ones((hidden,), jnp.float32),
            ffn_ln_b=jnp.zeros((hidden,), jnp.float32),
        ))
    return params


# ----------------------------- forward pass ----------------------------------

def bert_forward(params, input_ids, attention_mask, *, heads):
    """Equivalent of BERTModel.forward(inputs) with labels=None.

    Returns (logits, outputs) where outputs['last_hidden_state'] is (B, S, H).
    """
    B, S = input_ids.shape
    H = params['word_emb'].shape[1]
    Dh = H // heads
    scale = 1.0 / float(Dh) ** 0.5

    # --- embeddings (gather is plain-JAX glue) ---
    am_i = attention_mask.astype(jnp.int32)
    # RoBERTa-style position ids: padding_idx(=1) + cumulative non-pad position.
    # TODO(synk): derived from attention_mask, not (input_ids != padding_idx);
    # these coincide when the mask exactly marks non-pad tokens.
    pos_ids = jnp.cumsum(am_i, axis=1) * am_i + 1
    emb = (jnp.take(params['word_emb'], input_ids, axis=0)
           + jnp.take(params['pos_emb'], pos_ids, axis=0)
           + params['type_emb'][0][None, None, :])
    # normalize the f32 sum; cast to bf16 only on output (matches reference)
    x = pallas_layernorm(emb.reshape(B * S, H),
                         params['emb_ln_g'], params['emb_ln_b'])
    # TODO(synk): dropout layers are eval-mode identity (no RNG dropout applied).

    # --- extended additive attention mask (per batch, broadcast in-kernel) ---
    ext = ((1.0 - attention_mask.astype(jnp.float32)) * -10000.0)[:, None, :]  # (B,1,S)

    hidden_states = [x.reshape(B, S, H)]
    for lp in params['layers']:
        # self-attention block: fused QKV matmul -> attention -> fused proj+add+LN
        resid = x
        qkv = pallas_linear(x, lp['qkv_w'], lp['qkv_b'])            # (B*S, 3H)
        # head-major layout glue: (B*S, 3H) -> 3 x (B, heads, S, Dh)
        qkv5 = jnp.transpose(qkv.reshape(B, S, 3, heads, Dh), (2, 0, 3, 1, 4))
        ctx = pallas_attention(qkv5[0], qkv5[1], qkv5[2], ext, scale=scale)
        ctx = jnp.transpose(ctx, (0, 2, 1, 3)).reshape(B * S, H)    # (B*S, H)
        x = pallas_linear_add_ln(ctx, lp['ao_w'], lp['ao_b'],
                                 resid, lp['attn_ln_g'], lp['attn_ln_b'])

        # feed-forward block: up-proj+GELU -> fused down-proj+add+LN
        resid = x
        h = pallas_linear(x, lp['fi_w'], lp['fi_b'], activation="gelu")
        x = pallas_linear_add_ln(h, lp['fo_w'], lp['fo_b'],
                                 resid, lp['ffn_ln_g'], lp['ffn_ln_b'])

        hidden_states.append(x.reshape(B, S, H))

    last_hidden_state = x.reshape(B, S, H)
    # classification head on the [CLS] token (last_hidden_state[:, 0, :]).
    # TODO(synk): N=4 output is lane-sparse; done in plain JAX per perf review.
    cls = last_hidden_state[:, 0, :].astype(jnp.float32)
    logits = cls @ params['fc_w'] + params['fc_b']

    # TODO(synk): pooler_output is not materialized; the PyTorch module never uses it.
    outputs = {'last_hidden_state': last_hidden_state,
               'hidden_states': tuple(hidden_states)}
    return logits, outputs


# ----------------------------- main ------------------------------------------

if __name__ == "__main__":
    # small "roberta-like" config
    B, S = 2, 8
    HIDDEN, HEADS, LAYERS, INTER = 32, 2, 2, 64
    VOCAB, MAX_POS, TYPE_VOCAB, NUM_LABELS = 64, 16, 1, 4

    key = jax.random.PRNGKey(0)
    pkey, ikey = jax.random.split(key)
    params = init_params(pkey, vocab=VOCAB, max_pos=MAX_POS,
                         type_vocab=TYPE_VOCAB, hidden=HIDDEN, layers=LAYERS,
                         heads=HEADS, inter=INTER, num_labels=NUM_LABELS)

    input_ids = jax.random.randint(ikey, (B, S), 2, VOCAB, dtype=jnp.int32)
    attention_mask = jnp.ones((B, S), dtype=jnp.float32)

    logits, outputs = bert_forward(params, input_ids, attention_mask, heads=HEADS)
    jax.block_until_ready(logits)
    jax.block_until_ready(outputs['last_hidden_state'])

    assert logits.shape == (B, NUM_LABELS)
    assert outputs['last_hidden_state'].shape == (B, S, HIDDEN)
    assert len(outputs['hidden_states']) == LAYERS + 1
    assert jnp.all(jnp.isfinite(logits))
    print("KERNEL_OK")
</pallas_src>

<mosaic_0001>
module attributes {stable_mosaic.version = 11 : i64} {
  func.func @_ln_kernel(%arg0: i32, %arg1: memref<16x32xf32, #tpu.memory_space<vmem>>, %arg2: memref<1x32xf32, #tpu.memory_space<vmem>>, %arg3: memref<1x32xf32, #tpu.memory_space<vmem>>, %arg4: memref<16x32xbf16, #tpu.memory_space<vmem>>) attributes {dimension_semantics = [#tpu.dimension_semantics<parallel>], iteration_bounds = array<i64: 1>, scalar_prefetch = 0 : i64, scratch_operands = 0 : i64, tpu.core_type = #tpu.core_type<tc>, window_params = [{transform_indices = @transform_0, window_bounds = array<i64: 16, 32>}, {pipeline_mode = #tpu.pipeline_mode<synchronous>, transform_indices = @transform_1, window_bounds = array<i64: 1, 32>}, {pipeline_mode = #tpu.pipeline_mode<synchronous>, transform_indices = @transform_2, window_bounds = array<i64: 1, 32>}, {transform_indices = @transform_3, window_bounds = array<i64: 16, 32>}]} {
    %c0 = arith.constant 0 : index
    %c0_0 = arith.constant 0 : index
    %0 = vector.load %arg1[%c0, %c0_0] : memref<16x32xf32, #tpu.memory_space<vmem>>, vector<16x32xf32>
    %cst = arith.constant dense<0.000000e+00> : vector<16xf32>
    %1 = vector.multi_reduction <add>, %0, %cst [1] : vector<16x32xf32> to vector<16xf32>
    %2 = vector.shape_cast %1 : vector<16xf32> to vector<16x1xf32>
    %cst_1 = arith.constant 3.200000e+01 : f32
    %3 = vector.broadcast %cst_1 : f32 to vector<16x1xf32>
    %4 = arith.divf %2, %3 : vector<16x1xf32>
    %5 = vector.broadcast %4 : vector<16x1xf32> to vector<16x32xf32>
    %6 = arith.subf %0, %5 : vector<16x32xf32>
    %7 = arith.mulf %6, %6 : vector<16x32xf32>
    %cst_2 = arith.constant dense<0.000000e+00> : vector<16xf32>
    %8 = vector.multi_reduction <add>, %7, %cst_2 [1] : vector<16x32xf32> to vector<16xf32>
    %9 = vector.shape_cast %8 : vector<16xf32> to vector<16x1xf32>
    %cst_3 = arith.constant 3.200000e+01 : f32
    %10 = vector.broadcast %cst_3 : f32 to vector<16x1xf32>
    %11 = arith.divf %9, %10 : vector<16x1xf32>
    %12 = vector.broadcast %4 : vector<16x1xf32> to vector<16x32xf32>
    %13 = arith.subf %0, %12 : vector<16x32xf32>
    %cst_4 = arith.constant 9.99999974E-6 : f32
    %14 = vector.broadcast %cst_4 : f32 to vector<16x1xf32>
    %15 = arith.addf %11, %14 : vector<16x1xf32>
    %16 = math.rsqrt %15 : vector<16x1xf32>
    %17 = vector.broadcast %16 : vector<16x1xf32> to vector<16x32xf32>
    %18 = arith.mulf %13, %17 : vector<16x32xf32>
    %c0_5 = arith.constant 0 : index
    %c0_6 = arith.constant 0 : index
    %19 = vector.load %arg2[%c0_5, %c0_6] : memref<1x32xf32, #tpu.memory_space<vmem>>, vector<1x32xf32>
    %20 = vector.broadcast %19 : vector<1x32xf32> to vector<16x32xf32>
    %21 = arith.mulf %18, %20 : vector<16x32xf32>
    %c0_7 = arith.constant 0 : index
    %c0_8 = arith.constant 0 : index
    %22 = vector.load %arg3[%c0_7, %c0_8] : memref<1x32xf32, #tpu.memory_space<vmem>>, vector<1x32xf32>
    %23 = vector.broadcast %22 : vector<1x32xf32> to vector<16x32xf32>
    %24 = arith.addf %21, %23 : vector<16x32xf32>
    %25 = arith.truncf %24 : vector<16x32xf32> to vector<16x32xbf16>
    %c0_9 = arith.constant 0 : index
    %c0_10 = arith.constant 0 : index
    %26 = vector.load %arg4[%c0_9, %c0_10] : memref<16x32xbf16, #tpu.memory_space<vmem>>, vector<16x32xbf16>
    tpu.vector_store %arg4[%c0_9, %c0_10], %25 {strides = array<i32>} : memref<16x32xbf16, #tpu.memory_space<vmem>>, vector<16x32xbf16>,
    return
  }
  func.func @transform_0(%arg0: i32) -> (i32, i32) {
    %c0_i32 = arith.constant 0 : i32
    %c0_i32_0 = arith.constant 0 : i32
    return %arg0, %c0_i32 : i32, i32
  }
  func.func @transform_1(%arg0: i32) -> (i32, i32) {
    %c0_i32 = arith.constant 0 : i32
    %c0_i32_0 = arith.constant 0 : i32
    %c0_i32_1 = arith.constant 0 : i32
    return %c0_i32, %c0_i32_0 : i32, i32
  }
  func.func @transform_2(%arg0: i32) -> (i32, i32) {
    %c0_i32 = arith.constant 0 : i32
    %c0_i32_0 = arith.constant 0 : i32
    %c0_i32_1 = arith.constant 0 : i32
    return %c0_i32, %c0_i32_0 : i32, i32
  }
  func.func @transform_3(%arg0: i32) -> (i32, i32) {
    %c0_i32 = arith.constant 0 : i32
    %c0_i32_0 = arith.constant 0 : i32
    return %arg0, %c0_i32 : i32, i32
  }
}

</mosaic_0001>

<llo_original>
// kernel: tpu_custom_call.1
$region0: #{tpu_custom_call.1}
  #allocation0 [shape = 'u32[]', space=smem, size = 0x4, offset = 0x4, fixed_abs, tag = 'smem constant byte address 0x4 - core index']
  #allocation1 [shape = 'u32[144,128]{1,0:T(1,128)}', space=vmem, size = 0x12000, scoped, tag = 'internal scratch']
  %s0 = inlined_call_operand.hbm [shape: f32[16,32], index: 0, kind: input, shape index: {}]
  %s1 = inlined_call_operand.vmem [shape: f32[1,32], index: 1, kind: input, shape index: {}]
  %s2 = inlined_call_operand.vmem [shape: f32[1,32], index: 2, kind: input, shape index: {}]
  %s3 = inlined_call_operand.hbm [shape: bf16[16,32], index: 3, kind: output, shape index: {}]
  %s4 = sld [smem:[#allocation0]]
  $region26: #{tpu_custom_call.1} parent=0
    _
  %s6 = ssub.s32 1, %s4
  %s7 = scalar_select 0, %s6, %s4
  $region1: #{tpu_custom_call.1} parent=0
    #allocation2 [shape = 'u8[8192]{0}', space=vmem, size = 0x2000, scoped, tag = 'input window, operand 0, single buffered']
    #allocation3 [shape = 's32[1]{0}', space=sflag, size = 0x4, scoped, tag = 'scoped memory for tpu_custom_call.1']
    #allocation4 [shape = 's32[1]{0}', space=sflag, size = 0x4, scoped, tag = 'scoped memory for tpu_custom_call.1']
    #allocation5 [shape = 'u8[4096]{0}', space=vmem, size = 0x1000, scoped, tag = 'output window, operand 0, single buffered']
    %8 = vsyncpa [#allocation3], 0
    %9 = vsyncpa [#allocation4], 0
    // Predicated region
    $region2: #{tpu_custom_call.1} parent=1 // pred_check
      _
    $region3: #{tpu_custom_call.1} parent=1 // pred_check_branch
      %11 = sbr.rel (0) target = $region5
    $region4: #{tpu_custom_call.1} parent=1 // pred_region
      %s13 = ssub.s32 256, 256
      %14 = vsyncadd [#allocation3], %s13
      %s15 = sshll.u32 [#allocation2], 4
      %s16 = int_to_ptr.vmem [resolvable:$true] %s15
      %21 = dma.hbm_to_vmem [thread:$0]  %s0, 256, %s16, [#allocation3], 128, 128, 8
    $region5: #{tpu_custom_call.1} parent=1 // pred_fallthru
      _
    // Predicated region
    $region6: #{tpu_custom_call.1} parent=1 // pred_check
      _
    $region7: #{tpu_custom_call.1} parent=1 // pred_check_branch
      %23 = sbr.rel (0) target = $region9
    $region8: #{tpu_custom_call.1} parent=1 // pred_region
      _
    $region9: #{tpu_custom_call.1} parent=1 // pred_fallthru
      _
    // Predicated region
    $region10: #{tpu_custom_call.1} parent=1 // pred_check
      _
    $region11: #{tpu_custom_call.1} parent=1 // pred_check_branch
      %25 = sbr.rel (0) target = $region13
    $region12: #{tpu_custom_call.1} parent=1 // pred_region
      _
    $region13: #{tpu_custom_call.1} parent=1 // pred_fallthru
      _
    // Predicated region
    $region14: #{tpu_custom_call.1} parent=1 // pred_check
      _
    $region15: #{tpu_custom_call.1} parent=1 // pred_check_branch
      %27 = sbr.rel (0) target = $region17
    $region16: #{tpu_custom_call.1} parent=1 // pred_region
      %28 = dma.done [#allocation3], 256
    $region17: #{tpu_custom_call.1} parent=1 // pred_fallthru
      _
    %v29 = vld [vmem:[#allocation2] sm:$0xff]
    %v30 = vld [vmem:[#allocation2 + $0x8] sm:$0xff]
    %vm31 = vcmask 261120
    %v32 = vsel %vm31, %v29, 0.0
    %33 = vadd.xlane.f32.xlu0 %v32
    %v34 = vpop.xlane.xlu0 %33
    %v35 = vsel %vm31, %v30, 0.0
    %36 = vadd.xlane.f32.xlu0 %v35
    %v37 = vpop.xlane.xlu0 %36
    %v38 = vrcp.pop 32.0
    %v39 = vmul.f32 %v34, %v38
    %v40 = vmul.f32 %v37, %v38
    %v41 = vsub.f32 %v29, %v39
    %v42 = vsub.f32 %v30, %v40
    %v43 = vmul.f32 %v41, %v41
    %v44 = vmul.f32 %v42, %v42
    %v45 = vsel %vm31, %v43, 0.0
    %46 = vadd.xlane.f32.xlu0 %v45
    %v47 = vpop.xlane.xlu0 %46
    %v48 = vsel %vm31, %v44, 0.0
    %49 = vadd.xlane.f32.xlu0 %v48
    %v50 = vpop.xlane.xlu0 %49
    %v51 = vmul.f32 %v47, %v38
    %v52 = vmul.f32 %v50, %v38
    %v53 = vadd.f32 %v51, 1e-05
    %v54 = vadd.f32 %v52, 1e-05
    %v55 = vrsqrt.pop %v53
    %v56 = vrsqrt.pop %v54
    %v57 = vmul.f32 %v41, %v55
    %v58 = vmul.f32 %v42, %v56
    %v59 = vld [vmem:[%s1] sm:$0x1]
    %v61 = vlaneseq
    %v62 = vshrl.u32 %v61, 7
    %v63 = vsub.s32 0, %v62
    %v64 = vrot.slane %v59, %v63
    %v66 = vmul.f32 %v57, %v64
    %v67 = vmul.f32 %v58, %v64
    %v68 = vld [vmem:[%s2] sm:$0x1]
    %v70 = vlaneseq
    %v71 = vshrl.u32 %v70, 7
    %v72 = vsub.s32 0, %v71
    %v73 = vrot.slane %v68, %v72
    %v75 = vadd.f32 %v66, %v73
    %v76 = vadd.f32 %v67, %v73
    %v77 = vpack.c.bf16 %v76, %v75
    %v79 = vunpack.c.l.b16 %v77
    %v80 = vunpack.c.h.b16 %v77
    %v81 = vpack.c.b16 %v79, %v79
    %v82 = vpack.c.b16 %v80, %v80
    %vm85 = vcmask 257024
    %86 = vst.msk [vmem:[#allocation5] sm:$0xf] %vm85, %v81
    %87 = vst.msk [vmem:[#allocation5 + $0x4] sm:$0xf] %vm85, %v82
    // Predicated region
    $region18: #{tpu_custom_call.1} parent=1 // pred_check
      _
    $region19: #{tpu_custom_call.1} parent=1 // pred_check_branch
      %89 = sbr.rel (0) target = $region21
    $region20: #{tpu_custom_call.1} parent=1 // pred_region
      %s91 = ssub.s32 128, 128
      %92 = vsyncadd [#allocation4], %s91
      %s93 = sshll.u32 [#allocation5], 4
      %s94 = int_to_ptr.vmem [resolvable:$true] %s93
      %99 = dma.vmem_to_hbm [thread:$0]  %s94, 128, %s3, [#allocation4], 64, 64, 4
    $region21: #{tpu_custom_call.1} parent=1 // pred_fallthru
      _
    // Predicated region
    $region22: #{tpu_custom_call.1} parent=1 // pred_check
      _
    $region23: #{tpu_custom_call.1} parent=1 // pred_check_branch
      %101 = sbr.rel (0) target = $region25
    $region24: #{tpu_custom_call.1} parent=1 // pred_region
      %102 = dma.done [#allocation4], 128
    $region25: #{tpu_custom_call.1} parent=1 // pred_fallthru
      _
    %103 = vsyncpa [#allocation3], 1
    %104 = vsyncpa [#allocation4], 1

</llo_original>
